<compile_context>
chip_gen: v6e
topology: v6e:2x2x1
jax: 0.10.0
libtpu: 0.0.40
codegen_flags: <defaults>
</compile_context>

<pallas_src>
import math

import jax
import jax.numpy as jnp
import numpy as np
from jax import lax
from jax.experimental import pallas as pl
from jax.experimental.pallas import tpu as pltpu

LANE = 128       # last block dims are padded to this -> unmasked vld/vst
SUBLANE = 8      # second-to-last block dims must be a multiple of this


def _round_up(v, m):
    return ((v + m - 1) // m) * m


def _ensembled_linear_kernel_bias(idx_ref, x_ref, w_ref, b_ref, o_ref):
    # idx_ref: SMEM (E,) int32 — only consumed by the index_maps (weight gather).
    # x_ref: (1, tn, Fin)  w_ref: (1, Fout, Fin)  b_ref: (1, 1, Fout) f32
    # o_ref: (1, tn, Fout)
    del idx_ref
    y = lax.dot_general(
        x_ref[0], w_ref[0],
        # contract Fin (last dim of both) -> no in-kernel transpose of the weight.
        dimension_numbers=(((1,), (1,)), ((), ())),
        preferred_element_type=jnp.float32,
    )                                                   # (tn, Fout), f32 accumulate
    o_ref[0] = (y + b_ref[0]).astype(o_ref.dtype)


def _ensembled_linear_kernel_nobias(idx_ref, x_ref, w_ref, o_ref):
    del idx_ref
    y = lax.dot_general(
        x_ref[0], w_ref[0],
        dimension_numbers=(((1,), (1,)), ((), ())),
        preferred_element_type=jnp.float32,
    )
    o_ref[0] = y.astype(o_ref.dtype)


def ensembled_linear(x, weight, bias, n_symm, *, block_n=None, stream_dtype=None):
    """Forward pass of EnsembledLinear.

    x:      (E, N, Fin)                         per-member inputs
    weight: (E - n_symm, Fout, Fin)             stored (unique) weights
    bias:   (E - n_symm, Fout) or None
    stream_dtype: optional dtype (e.g. jnp.bfloat16) to stream x / weight in;
                  accumulation stays f32, output keeps x.dtype.
    """
    E, N, Fin = x.shape
    S, Fout, Fin_w = weight.shape
    assert Fin_w == Fin and S == E - n_symm

    out_dtype = x.dtype
    stream_dt = jnp.dtype(stream_dtype) if stream_dtype is not None else jnp.dtype(x.dtype)
    has_bias = bias is not None

    # ---- effective-member -> stored-member gather index (replaces the per-call
    #      concat + repeat_interleave(2) HBM weight copy of the PyTorch forward).
    eff = np.arange(E)
    member_idx = jnp.asarray(
        np.where(eff < 2 * n_symm, eff // 2, eff - n_symm), dtype=jnp.int32)

    # ---- lane-density padding: make Fin/Fout multiples of 128 so every load and
    #      the output store are unmasked.  Zero padding is numerically exact.
    Fin_p = _round_up(Fin, LANE)
    Fout_p = _round_up(Fout, LANE)
    x_p = x if Fin_p == Fin else jnp.pad(x, ((0, 0), (0, 0), (0, Fin_p - Fin)))
    w_p = weight
    if Fin_p != Fin or Fout_p != Fout:
        w_p = jnp.pad(weight, ((0, 0), (0, Fout_p - Fout), (0, Fin_p - Fin)))
    if x_p.dtype != stream_dt:
        x_p = x_p.astype(stream_dt)
    if w_p.dtype != stream_dt:
        w_p = w_p.astype(stream_dt)
    if has_bias:
        b_p = bias.astype(jnp.float32)                  # cast once, in the wrapper
        if Fout_p != Fout:
            b_p = jnp.pad(b_p, ((0, 0), (0, Fout_p - Fout)))
        b_p = b_p.reshape(S, 1, Fout_p)

    # ---- VMEM-budget-driven tiling of the token axis --------------------------
    try:
        vmem_cap = int(pltpu.get_tpu_info().vmem_capacity_bytes)
    except Exception:  # no TPU info available -> assume the smallest (v7x, 64 MiB)
        vmem_cap = 64 << 20
    # Keep double-buffered tiles well under per-core VMEM (v7x ~25 MiB, v5e/v6e ~51 MiB).
    tile_budget = int(vmem_cap * 0.4)

    x_item = stream_dt.itemsize
    w_item = stream_dt.itemsize
    o_item = jnp.dtype(out_dtype).itemsize
    # BlockSpec double-buffers every operand, including the (revisited) weight tile.
    fixed_bytes = 2 * Fout_p * Fin_p * w_item + (2 * Fout_p * 4 if has_bias else 0)
    per_row_bytes = 2 * (Fin_p * x_item + Fout_p * o_item)      # x tile + out tile

    if block_n is None:
        block_n = max(SUBLANE, (tile_budget - fixed_bytes) // per_row_bytes)
        block_n = min(block_n, 4096)                     # diminishing returns beyond
        if block_n >= N:
            block_n = N                                  # full-dim block is always legal
        else:
            block_n = max(SUBLANE, (block_n // SUBLANE) * SUBLANE)
        # v7x megacore: guarantee >= 2 grid steps on a parallel axis even when E == 1.
        if E == 1 and block_n >= N and N >= 2 * SUBLANE:
            block_n = _round_up((N + 1) // 2, SUBLANE)
    n_steps = pl.cdiv(N, block_n)                        # edge block handled by Pallas
    grid = (E, n_steps)

    working_set = (2 * block_n * Fin_p * x_item + 2 * block_n * Fout_p * o_item
                   + fixed_bytes)
    vmem_limit = int(min(vmem_cap, max(32 << 20, working_set + (8 << 20))))

    cost = pl.CostEstimate(
        flops=2 * E * N * Fin_p * Fout_p,
        transcendentals=0,
        bytes_accessed=(x_p.size * x_item
                        + E * Fout_p * Fin_p * w_item
                        + (E * Fout_p * 4 if has_bias else 0)
                        + E * N * Fout_p * o_item),
    )

    x_spec = pl.BlockSpec((1, block_n, Fin_p), lambda e, n, idx_ref: (e, n, 0))
    w_spec = pl.BlockSpec((1, Fout_p, Fin_p), lambda e, n, idx_ref: (idx_ref[e], 0, 0))
    o_spec = pl.BlockSpec((1, block_n, Fout_p), lambda e, n, idx_ref: (e, n, 0))

    if has_bias:
        b_spec = pl.BlockSpec((1, 1, Fout_p), lambda e, n, idx_ref: (idx_ref[e], 0, 0))
        kernel = _ensembled_linear_kernel_bias
        in_specs = [x_spec, w_spec, b_spec]
        operands = (member_idx, x_p, w_p, b_p)
    else:
        kernel = _ensembled_linear_kernel_nobias
        in_specs = [x_spec, w_spec]
        operands = (member_idx, x_p, w_p)

    # NOTE: if profiling shows exposed DMA at the chosen block_n, bump the x/out
    # specs to pipeline_mode=pl.Buffered(3) (VMEM budget above has headroom).
    out = pl.pallas_call(
        kernel,
        out_shape=jax.ShapeDtypeStruct((E, N, Fout_p), out_dtype),
        grid_spec=pltpu.PrefetchScalarGridSpec(
            num_scalar_prefetch=1,
            grid=grid,
            in_specs=in_specs,
            out_specs=o_spec,
        ),
        compiler_params=pltpu.CompilerParams(
            # Disjoint output blocks, no accumulation -> both axes fully parallel
            # (lets v7x shard across its two TensorCores).
            dimension_semantics=("parallel", "parallel"),
            vmem_limit_bytes=vmem_limit),
        cost_estimate=cost,
    )(*operands)

    return out[..., :Fout] if Fout_p != Fout else out


def ensembled_linear_ref(x, weight, bias, n_symm):
    # Pure-JAX reference mirroring the PyTorch forward exactly.
    W = jnp.concatenate(
        [jnp.repeat(weight[:n_symm], 2, axis=0), weight[n_symm:]], axis=0)
    out = jnp.einsum("eni,eoi->eno", x, W)
    if bias is not None:
        b = jnp.concatenate(
            [jnp.repeat(bias[:n_symm], 2, axis=0), bias[n_symm:]], axis=0)
        out = out + b[:, None, :]
    return out


if __name__ == "__main__":
    # Small, module-consistent shapes.
    ensemble_size = 6
    n_symm = 2
    in_features = 16
    out_features = 32
    N = 8                                   # tokens per ensemble member
    S = ensemble_size - n_symm              # stored (unique) members

    key = jax.random.PRNGKey(0)
    k_w, k_b, k_x = jax.random.split(key, 3)

    # Deterministic init mimicking kaiming_uniform_(a=sqrt(5)):
    # bound = sqrt(6 / ((1 + a^2) * fan_in)) = 1/sqrt(fan_in); bias same bound.
    fan_in = in_features
    w_bound = 1.0 / math.sqrt(fan_in)
    weight = jax.random.uniform(
        k_w, (S, out_features, in_features), jnp.float32, -w_bound, w_bound)
    bias = jax.random.uniform(
        k_b, (S, out_features), jnp.float32, -w_bound, w_bound)
    x = jax.random.normal(k_x, (ensemble_size, N, in_features), jnp.float32)

    # f32 path (exact semantics of the PyTorch module).
    out = jax.block_until_ready(ensembled_linear(x, weight, bias, n_symm))
    ref = ensembled_linear_ref(x, weight, bias, n_symm)
    assert out.shape == (ensemble_size, N, out_features)
    assert jnp.allclose(out, ref, atol=1e-5, rtol=1e-5), "mismatch vs reference (f32)"

    # bias=None variant (skips the bias DMA and add).
    out_nb = jax.block_until_ready(ensembled_linear(x, weight, None, n_symm))
    ref_nb = ensembled_linear_ref(x, weight, None, n_symm)
    assert jnp.allclose(out_nb, ref_nb, atol=1e-5, rtol=1e-5), "mismatch (no bias)"

    # bf16-streaming variant (memory-bound win; MXU still accumulates in f32).
    out_bf = jax.block_until_ready(
        ensembled_linear(x, weight, bias, n_symm, stream_dtype=jnp.bfloat16))
    assert jnp.allclose(out_bf, ref, atol=5e-2, rtol=5e-2), "mismatch (bf16 stream)"

    print("KERNEL_OK")
</pallas_src>

<mosaic_0001>
module attributes {stable_mosaic.version = 11 : i64} {
  func.func @_ensembled_linear_kernel_bias(%arg0: i32, %arg1: i32, %arg2: memref<6xi32, #tpu.memory_space<smem>>, %arg3: memref<1x8x128xf32, #tpu.memory_space<vmem>>, %arg4: memref<1x128x128xf32, #tpu.memory_space<vmem>>, %arg5: memref<1x1x128xf32, #tpu.memory_space<vmem>>, %arg6: memref<1x8x128xf32, #tpu.memory_space<vmem>>) attributes {dimension_semantics = [#tpu.dimension_semantics<parallel>, #tpu.dimension_semantics<parallel>], iteration_bounds = array<i64: 6, 1>, scalar_prefetch = 1 : i64, scratch_operands = 0 : i64, tpu.core_type = #tpu.core_type<tc>, window_params = [{transform_indices = @transform_0, window_bounds = array<i64: 1, 8, 128>}, {transform_indices = @transform_1, window_bounds = array<i64: 1, 128, 128>}, {transform_indices = @transform_2, window_bounds = array<i64: 1, 1, 128>}, {transform_indices = @transform_3, window_bounds = array<i64: 1, 8, 128>}]} {
    %c0 = arith.constant 0 : index
    %c0_0 = arith.constant 0 : index
    %c0_1 = arith.constant 0 : index
    %0 = vector.load %arg3[%c0, %c0_0, %c0_1] : memref<1x8x128xf32, #tpu.memory_space<vmem>>, vector<1x8x128xf32>
    %1 = vector.shape_cast %0 : vector<1x8x128xf32> to vector<8x128xf32>
    %c0_2 = arith.constant 0 : index
    %c0_3 = arith.constant 0 : index
    %c0_4 = arith.constant 0 : index
    %2 = vector.load %arg4[%c0_2, %c0_3, %c0_4] : memref<1x128x128xf32, #tpu.memory_space<vmem>>, vector<1x128x128xf32>
    %3 = vector.shape_cast %2 : vector<1x128x128xf32> to vector<128x128xf32>
    %cst = arith.constant dense<0.000000e+00> : vector<8x128xf32>
    %4 = tpu.matmul %1, %3, %cst {dimension_numbers = #tpu.dot_dimension_numbers<[1], [1], [0], [0], [0, 0, 1, 0], [], []>} : vector<8x128xf32>, vector<128x128xf32>, vector<8x128xf32> -> vector<8x128xf32>
    %c0_5 = arith.constant 0 : index
    %c0_6 = arith.constant 0 : index
    %c0_7 = arith.constant 0 : index
    %5 = vector.load %arg5[%c0_5, %c0_6, %c0_7] : memref<1x1x128xf32, #tpu.memory_space<vmem>>, vector<1x1x128xf32>
    %6 = vector.shape_cast %5 : vector<1x1x128xf32> to vector<1x128xf32>
    %7 = vector.broadcast %6 : vector<1x128xf32> to vector<8x128xf32>
    %8 = arith.addf %4, %7 : vector<8x128xf32>
    %c0_8 = arith.constant 0 : index
    %c0_9 = arith.constant 0 : index
    %c0_10 = arith.constant 0 : index
    %9 = vector.load %arg6[%c0_8, %c0_9, %c0_10] : memref<1x8x128xf32, #tpu.memory_space<vmem>>, vector<1x8x128xf32>
    %10 = vector.shape_cast %9 : vector<1x8x128xf32> to vector<8x128xf32>
    %11 = vector.shape_cast %8 : vector<8x128xf32> to vector<1x8x128xf32>
    tpu.vector_store %arg6[%c0_8, %c0_9, %c0_10], %11 {strides = array<i32>} : memref<1x8x128xf32, #tpu.memory_space<vmem>>, vector<1x8x128xf32>,
    return
  }
  func.func @transform_0(%arg0: i32, %arg1: i32, %arg2: memref<6xi32, #tpu.memory_space<smem>>) -> (i32, i32, i32) {
    %c0_i32 = arith.constant 0 : i32
    %c0_i32_0 = arith.constant 0 : i32
    return %arg0, %arg1, %c0_i32 : i32, i32, i32
  }
  func.func @transform_1(%arg0: i32, %arg1: i32, %arg2: memref<6xi32, #tpu.memory_space<smem>>) -> (i32, i32, i32) {
    %0 = arith.index_cast %arg0 : i32 to index
    %1 = memref.load %arg2[%0] : memref<6xi32, #tpu.memory_space<smem>>
    %c0_i32 = arith.constant 0 : i32
    %c0_i32_0 = arith.constant 0 : i32
    %c0_i32_1 = arith.constant 0 : i32
    return %1, %c0_i32, %c0_i32_0 : i32, i32, i32
  }
  func.func @transform_2(%arg0: i32, %arg1: i32, %arg2: memref<6xi32, #tpu.memory_space<smem>>) -> (i32, i32, i32) {
    %0 = arith.index_cast %arg0 : i32 to index
    %1 = memref.load %arg2[%0] : memref<6xi32, #tpu.memory_space<smem>>
    %c0_i32 = arith.constant 0 : i32
    %c0_i32_0 = arith.constant 0 : i32
    %c0_i32_1 = arith.constant 0 : i32
    return %1, %c0_i32, %c0_i32_0 : i32, i32, i32
  }
  func.func @transform_3(%arg0: i32, %arg1: i32, %arg2: memref<6xi32, #tpu.memory_space<smem>>) -> (i32, i32, i32) {
    %c0_i32 = arith.constant 0 : i32
    %c0_i32_0 = arith.constant 0 : i32
    return %arg0, %arg1, %c0_i32 : i32, i32, i32
  }
}

</mosaic_0001>

<llo_original>
// kernel: tpu_custom_call.1
$region0: #{tpu_custom_call.1}
  #allocation0 [shape = 'u32[]', space=smem, size = 0x4, offset = 0x4, fixed_abs, tag = 'smem constant byte address 0x4 - core index']
  #allocation1 [shape = 'u32[144,128]{1,0:T(1,128)}', space=vmem, size = 0x12000, scoped, tag = 'internal scratch']
  #allocation2 [shape = 's32[1]{0}', space=sflag, size = 0x4, scoped, tag = 'scoped memory for tpu_custom_call.1']
  #allocation3 [shape = 'u8[512]{0}', space=smem, size = 0x200, scoped, tag = 'prefetched SMEM operand 0']
  %s0 = inlined_call_operand.hbm [shape: s32[6], index: 0, kind: input, shape index: {}]
  %s1 = inlined_call_operand.hbm [shape: f32[6,8,128], index: 1, kind: input, shape index: {}]
  %s2 = inlined_call_operand.hbm [shape: f32[4,128,128], index: 2, kind: input, shape index: {}]
  %s3 = inlined_call_operand.vmem [shape: f32[4,1,128], index: 3, kind: input, shape index: {}]
  %s4 = inlined_call_operand.hbm [shape: f32[6,8,128], index: 4, kind: output, shape index: {}]
  %s5 = sld [smem:[#allocation0]]
  $region53: #{tpu_custom_call.1} parent=0
    _
  %s7 = ssub.s32 1, %s5
  %s8 = scalar_select 0, %s7, %s5
  %10 = dma.hbm_to_smem %s0, 16, [#allocation3], [#allocation2]
  %11 = dma.done [#allocation2], 16
  %12 = sfence
  $region1: #{tpu_custom_call.1} parent=0
    #allocation4 [shape = 'u8[8192]{0}', space=vmem, size = 0x2000, scoped, tag = 'input window, operand 1']
    #allocation5 [shape = 's32[2]{0}', space=sflag, size = 0x8, scoped, tag = 'scoped memory for tpu_custom_call.1']
    #allocation6 [shape = 's32[2]{0}', space=sflag, size = 0x8, scoped, tag = 'scoped memory for tpu_custom_call.1']
    #allocation7 [shape = 'u8[131072]{0}', space=vmem, size = 0x20000, scoped, tag = 'input window, operand 2']
    #allocation8 [shape = 's32[2]{0}', space=sflag, size = 0x8, scoped, tag = 'scoped memory for tpu_custom_call.1']
    #allocation9 [shape = 'u8[8192]{0}', space=vmem, size = 0x2000, scoped, tag = 'output window, operand 0']
    %13 = vsyncpa [#allocation5], 0
    %s14 = scalar_lea.sflag [#allocation5], 1
    %15 = vsyncpa %s14, 0
    %16 = vsyncpa [#allocation8], 0
    %s17 = scalar_lea.sflag [#allocation8], 1
    %18 = vsyncpa %s17, 0
    %19 = vsyncpa [#allocation6], 0
    %s20 = scalar_lea.sflag [#allocation6], 1
    %21 = vsyncpa %s20, 0
    loop: start=0, step=1, limit=8
    $region2: #{tpu_custom_call.1} parent=1 // loop_pre_header
      _
    $region3: #{tpu_custom_call.1} parent=1 // loop_header
      %s23 = sphi 0, %s27
      %p24 = scmp.ge.s32.totalorder %s23, 8
      %s30 = sphi 0, %s42
      %s31 = sphi 0, %s38
      %s32 = sphi 0, %s30
      %s33 = sphi 0, %s31
      %s34 = sphi 0, %s32
      %s35 = sphi 0, %s33
      %s47 = sphi 0, %s49
      %s50 = sphi 0, %s47
      %s51 = sphi 0, %s50
      %s67 = sphi 0, %s51
      %s75 = sphi 0, %s77
      %s78 = sphi 0, %s75
      %s79 = sphi 0, %s78
      %s95 = sphi 0, %s79
      %s103 = sphi 0, %s105
      %s106 = sphi 0, %s103
      %s107 = sphi 0, %s106
      %s123 = sphi 0, %s107
      %s131 = sphi 0, %s133
      %s134 = sphi 0, %s131
      %s135 = sphi 0, %s134
      %s151 = sphi 0, %s135
    $region4: #{tpu_custom_call.1} parent=1 // loop_header_branch
      %26 = sbr.rel (%p24) target = $region8
    $region5: #{tpu_custom_call.1} parent=1 // loop_body
      %s28 = ssub.s32 %s23, 1
      %s29 = ssub.s32 %s23, 2
      %s36 = sadd.s32 1, %s31
      %p37 = scmp.ge.s32.totalorder %s36, 1
      %s38 = scalar_select %p37, 0, %s36
      %s39 = sadd.s32 1, %s30
      %s40 = scalar_select %p37, %s39, %s30
      %p41 = scmp.ge.s32.totalorder %s40, 6
      %s42 = scalar_select %p41, 0, %s40
      %s43 = ssub.s32 %s30, %s42
      %s44 = ssub.s32 %s31, %s38
      %s45 = sor.u32 %s43, %s44
      %p46 = scmp.eq.s32.totalorder %s45, 0
      %s48 = sadd.s32 %s47, 1
      %s49 = scalar_select %p46, %s47, %s48
      %p52 = pneg %p46
      %p53 = scmp.eq.s32.totalorder %s23, 5
      %p54 = por %p52, %p53
      %p55 = scmp.ne.s32.totalorder %s47, %s50
      %p56 = scmp.eq.s32.totalorder %s23, 0
      %p57 = por %p55, %p56
      %p58 = scmp.ne.s32.totalorder %s47, %s50
      %p59 = scmp.eq.s32.totalorder %s28, 5
      %p60 = por %p58, %p59
      %p61 = scmp.ne.s32.totalorder %s50, %s51
      %p62 = scmp.eq.s32.totalorder %s28, 0
      %p63 = por %p61, %p62
      %p64 = scmp.ne.s32.totalorder %s50, %s51
      %p65 = scmp.eq.s32.totalorder %s29, 5
      %p66 = por %p64, %p65
      %p68 = scmp.ne.s32.totalorder %s51, %s67
      %p69 = scmp.eq.s32.totalorder %s29, 0
      %p70 = por %p68, %p69
      %s71 = sld [smem:[#allocation3 + %s30]]
      %s72 = sld [smem:[#allocation3 + %s42]]
      %s73 = ssub.s32 %s71, %s72
      %p74 = scmp.eq.s32.totalorder %s73, 0
      %s76 = sadd.s32 %s75, 1
      %s77 = scalar_select %p74, %s75, %s76
      %p80 = pneg %p74
      %p81 = scmp.eq.s32.totalorder %s23, 5
      %p82 = por %p80, %p81
      %p83 = scmp.ne.s32.totalorder %s75, %s78
      %p84 = scmp.eq.s32.totalorder %s23, 0
      %p85 = por %p83, %p84
      %p86 = scmp.ne.s32.totalorder %s75, %s78
      %p87 = scmp.eq.s32.totalorder %s28, 5
      %p88 = por %p86, %p87
      %p89 = scmp.ne.s32.totalorder %s78, %s79
      %p90 = scmp.eq.s32.totalorder %s28, 0
      %p91 = por %p89, %p90
      %p92 = scmp.ne.s32.totalorder %s78, %s79
      %p93 = scmp.eq.s32.totalorder %s29, 5
      %p94 = por %p92, %p93
      %p96 = scmp.ne.s32.totalorder %s79, %s95
      %p97 = scmp.eq.s32.totalorder %s29, 0
      %p98 = por %p96, %p97
      %s99 = sld [smem:[#allocation3 + %s30]]
      %s100 = sld [smem:[#allocation3 + %s42]]
      %s101 = ssub.s32 %s99, %s100
      %p102 = scmp.eq.s32.totalorder %s101, 0
      %s104 = sadd.s32 %s103, 1
      %s105 = scalar_select %p102, %s103, %s104
      %p108 = pneg %p102
      %p109 = scmp.eq.s32.totalorder %s23, 5
      %p110 = por %p108, %p109
      %p111 = scmp.ne.s32.totalorder %s103, %s106
      %p112 = scmp.eq.s32.totalorder %s23, 0
      %p113 = por %p111, %p112
      %p114 = scmp.ne.s32.totalorder %s103, %s106
      %p115 = scmp.eq.s32.totalorder %s28, 5
      %p116 = por %p114, %p115
      %p117 = scmp.ne.s32.totalorder %s106, %s107
      %p118 = scmp.eq.s32.totalorder %s28, 0
      %p119 = por %p117, %p118
      %p120 = scmp.ne.s32.totalorder %s106, %s107
      %p121 = scmp.eq.s32.totalorder %s29, 5
      %p122 = por %p120, %p121
      %p124 = scmp.ne.s32.totalorder %s107, %s123
      %p125 = scmp.eq.s32.totalorder %s29, 0
      %p126 = por %p124, %p125
      %s127 = ssub.s32 %s30, %s42
      %s128 = ssub.s32 %s31, %s38
      %s129 = sor.u32 %s127, %s128
      %p130 = scmp.eq.s32.totalorder %s129, 0
      %s132 = sadd.s32 %s131, 1
      %s133 = scalar_select %p130, %s131, %s132
      %p136 = pneg %p130
      %p137 = scmp.eq.s32.totalorder %s23, 5
      %p138 = por %p136, %p137
      %p139 = scmp.ne.s32.totalorder %s131, %s134
      %p140 = scmp.eq.s32.totalorder %s23, 0
      %p141 = por %p139, %p140
      %p142 = scmp.ne.s32.totalorder %s131, %s134
      %p143 = scmp.eq.s32.totalorder %s28, 5
      %p144 = por %p142, %p143
      %p145 = scmp.ne.s32.totalorder %s134, %s135
      %p146 = scmp.eq.s32.totalorder %s28, 0
      %p147 = por %p145, %p146
      %p148 = scmp.ne.s32.totalorder %s134, %s135
      %p149 = scmp.eq.s32.totalorder %s29, 5
      %p150 = por %p148, %p149
      %p152 = scmp.ne.s32.totalorder %s135, %s151
      %p153 = scmp.eq.s32.totalorder %s29, 0
      %p154 = por %p152, %p153
      %p155 = scmp.le.s32.totalorder 1, %s23
      %p156 = scmp.lt.s32.totalorder %s23, 7
      %p157 = pnand %p155, %p156
      %p158 = pneg %p157
      // Predicated region
      $region9: #{tpu_custom_call.1} parent=5 // pred_check
        _
      $region10: #{tpu_custom_call.1} parent=5 // pred_check_branch
        %160 = sbr.rel (%p157) target = $region12
      $region11: #{tpu_custom_call.1} parent=5 // pred_region
        %s161 = ssub.s32 %s23, 1
      $region12: #{tpu_custom_call.1} parent=5 // pred_fallthru
        _
      %p162 = scmp.lt.s32.totalorder %s23, 6
      // Predicated region
      $region13: #{tpu_custom_call.1} parent=5 // pred_check
        %p163 = pneg %p162
      $region14: #{tpu_custom_call.1} parent=5 // pred_check_branch
        %165 = sbr.rel (%p163) target = $region16
      $region15: #{tpu_custom_call.1} parent=5 // pred_region
        // Predicated region
        $region17: #{tpu_custom_call.1} parent=15 // pred_check
          %p166 = pneg %p57
        $region18: #{tpu_custom_call.1} parent=15 // pred_check_branch
          %168 = sbr.rel (%p166) target = $region20
        $region19: #{tpu_custom_call.1} parent=15 // pred_region
          %s169 = sand.u32 %s47, 1
          %s170 = scalar_lea.sflag [#allocation5], %s169
          %s171 = sand.u32 %s47, 1
          %s172 = smul.addr %s171, 8
          %s173 = scalar_lea.vmem [#allocation4], %s172
          %s175 = ssub.s32 128, 128
          %176 = vsyncadd %s170, %s175
          %s177 = sadd.s32 %s31, %s30
          %s178 = smul.addr %s177, 128
          %s179 = scalar_lea.hbm %s1, %s178
          %s181 = sshll.u32 %s173, 4
          %s182 = int_to_ptr.vmem [resolvable:$true] %s181
          %184 = dma.hbm_to_vmem [thread:$0]  %s179, 128, %s182, %s170
        $region20: #{tpu_custom_call.1} parent=15 // pred_fallthru
          _
        // Predicated region
        $region21: #{tpu_custom_call.1} parent=15 // pred_check
          %p185 = pneg %p85
        $region22: #{tpu_custom_call.1} parent=15 // pred_check_branch
          %187 = sbr.rel (%p185) target = $region24
        $region23: #{tpu_custom_call.1} parent=15 // pred_region
          %s188 = sand.u32 %s75, 1
          %s189 = scalar_lea.sflag [#allocation8], %s188
          %s190 = sand.u32 %s75, 1
          %s191 = smul.addr %s190, 128
          %s192 = scalar_lea.vmem [#allocation7], %s191
          %s193 = sld [smem:[#allocation3 + %s30]]
          %s195 = ssub.s32 2048, 2048
          %196 = vsyncadd %s189, %s195
          %s197 = smul.addr %s193, 16
          %s198 = smul.addr %s197, 128
          %s199 = scalar_lea.hbm %s2, %s198
          %s200 = sshll.u32 %s192, 4
          %s201 = int_to_ptr.vmem [resolvable:$true] %s200
          %206 = dma.hbm_to_vmem [thread:$0]  %s199, 2048, %s201, %s189, 128, 128, 8
        $region24: #{tpu_custom_call.1} parent=15 // pred_fallthru
          _
        // Predicated region
        $region25: #{tpu_custom_call.1} parent=15 // pred_check
          %p207 = pneg %p113
        $region26: #{tpu_custom_call.1} parent=15 // pred_check_branch
          %209 = sbr.rel (%p207) target = $region28
        $region27: #{tpu_custom_call.1} parent=15 // pred_region
          %s210 = sld [smem:[#allocation3 + %s30]]
          %p211 = scmp.lt.s32.totalorder %s210, 3
          %s212 = scalar_select %p211, %s210, 3
          %s213 = scalar_lea.vmem %s3, %s212
          %s214 = sld [smem:[#allocation3 + %s30]]
        $region28: #{tpu_custom_call.1} parent=15 // pred_fallthru
          _
      $region16: #{tpu_custom_call.1} parent=5 // pred_fallthru
        _
      %p215 = scmp.le.s32.totalorder 1, %s23
      %p216 = scmp.lt.s32.totalorder %s23, 7
      %p217 = pnand %p215, %p216
      %p218 = pneg %p217
      // Predicated region
      $region29: #{tpu_custom_call.1} parent=5 // pred_check
        _
      $region30: #{tpu_custom_call.1} parent=5 // pred_check_branch
        %220 = sbr.rel (%p217) target = $region32
      $region31: #{tpu_custom_call.1} parent=5 // pred_region
        %s221 = ssub.s32 %s23, 1
        %s222 = sand.u32 %s50, 1
        %s223 = scalar_lea.sflag [#allocation5], %s222
        %s224 = sand.u32 %s50, 1
        %s225 = smul.addr %s224, 8
        %s226 = scalar_lea.vmem [#allocation4], %s225
        // Predicated region
        $region33: #{tpu_custom_call.1} parent=31 // pred_check
          %p227 = pneg %p63
        $region34: #{tpu_custom_call.1} parent=31 // pred_check_branch
          %229 = sbr.rel (%p227) target = $region36
        $region35: #{tpu_custom_call.1} parent=31 // pred_region
          %230 = dma.done %s223, 128
        $region36: #{tpu_custom_call.1} parent=31 // pred_fallthru
          _
        %s231 = sand.u32 %s78, 1
        %s232 = scalar_lea.sflag [#allocation8], %s231
        %s233 = sand.u32 %s78, 1
        %s234 = smul.addr %s233, 128
        %s235 = scalar_lea.vmem [#allocation7], %s234
        // Predicated region
        $region37: #{tpu_custom_call.1} parent=31 // pred_check
          %p236 = pneg %p91
        $region38: #{tpu_custom_call.1} parent=31 // pred_check_branch
          %238 = sbr.rel (%p236) target = $region40
        $region39: #{tpu_custom_call.1} parent=31 // pred_region
          %239 = dma.done %s232, 2048
        $region40: #{tpu_custom_call.1} parent=31 // pred_fallthru
          _
        %s240 = sand.u32 %s50, 1
        %s241 = scalar_lea.sflag [#allocation5], %s240
        %s242 = sand.u32 %s50, 1
        %s243 = smul.addr %s242, 8
        %s244 = scalar_lea.vmem [#allocation4], %s243
        %p245 = pneg %p63
        %p246 = pneg %p60
        %s247 = sand.u32 %s78, 1
        %s248 = scalar_lea.sflag [#allocation8], %s247
        %s249 = sand.u32 %s78, 1
        %s250 = smul.addr %s249, 128
        %s251 = scalar_lea.vmem [#allocation7], %s250
        %p252 = pneg %p91
        %p253 = pneg %p88
        %s254 = sld [smem:[#allocation3 + %s32]]
        %p255 = scmp.lt.s32.totalorder %s254, 3
        %s256 = scalar_select %p255, %s254, 3
        %s257 = scalar_lea.vmem %s3, %s256
        %p258 = pneg %p119
        %p259 = pneg %p116
        %p260 = pneg %p147
        %p261 = pneg %p144
        %s262 = sand.u32 %s134, 1
        %s263 = scalar_lea.sflag [#allocation6], %s262
        %s264 = sand.u32 %s134, 1
        %s265 = smul.addr %s264, 8
        %s266 = scalar_lea.vmem [#allocation9], %s265
        %s267 = sld [smem:[#allocation3 + %s32]]
        %s268 = sld [smem:[#allocation3 + %s32]]
        %p269 = scmp.lt.s32.totalorder %s268, 3
        %s270 = scalar_select %p269, %s268, 3
        %s271 = scalar_lea.vmem %s3, %s270
        %s272 = sld [smem:[#allocation3 + %s32]]
        %v273 = vld [vmem:[%s226] sm:$0xff]
        %v274 = vld [vmem:[%s235] sm:$0xff]
        %v275 = vld [vmem:[%s235 + $0x8] sm:$0xff]
        %v276 = vld [vmem:[%s235 + $0x10] sm:$0xff]
        %v277 = vld [vmem:[%s235 + $0x18] sm:$0xff]
        %v278 = vld [vmem:[%s235 + $0x20] sm:$0xff]
        %v279 = vld [vmem:[%s235 + $0x28] sm:$0xff]
        %v280 = vld [vmem:[%s235 + $0x30] sm:$0xff]
        %v281 = vld [vmem:[%s235 + $0x38] sm:$0xff]
        %v282 = vld [vmem:[%s235 + $0x40] sm:$0xff]
        %v283 = vld [vmem:[%s235 + $0x48] sm:$0xff]
        %v284 = vld [vmem:[%s235 + $0x50] sm:$0xff]
        %v285 = vld [vmem:[%s235 + $0x58] sm:$0xff]
        %v286 = vld [vmem:[%s235 + $0x60] sm:$0xff]
        %v287 = vld [vmem:[%s235 + $0x68] sm:$0xff]
        %v288 = vld [vmem:[%s235 + $0x70] sm:$0xff]
        %v289 = vld [vmem:[%s235 + $0x78] sm:$0xff]
        %v290 = vld [vmem:[%s271] sm:$0x1]
        %v292 = vlaneseq
        %v293 = vshrl.u32 %v292, 7
        %v294 = vsub.s32 0, %v293
        %v295 = vrot.slane %v290, %v294
        %297 = vmatprep.subr.mxu0 0.0
        %298 = vmatpush1.xpose.msra.mxu0 %v289
        %299 = vmatprep.subr.mxu0 0.0
        %300 = vmatpush1.xpose.msra.mxu0 %v288
        %301 = vmatprep.subr.mxu0 0.0
        %302 = vmatpush1.xpose.msra.mxu0 %v287
        %303 = vmatprep.subr.mxu0 0.0
        %304 = vmatpush1.xpose.msra.mxu0 %v286
        %305 = vmatprep.subr.mxu0 0.0
        %306 = vmatpush1.xpose.msra.mxu0 %v285
        %307 = vmatprep.subr.mxu0 0.0
        %308 = vmatpush1.xpose.msra.mxu0 %v284
        %309 = vmatprep.subr.mxu0 0.0
        %310 = vmatpush1.xpose.msra.mxu0 %v283
        %311 = vmatprep.subr.mxu0 0.0
        %312 = vmatpush1.xpose.msra.mxu0 %v282
        %313 = vmatprep.subr.mxu0 0.0
        %314 = vmatpush1.xpose.msra.mxu0 %v281
        %315 = vmatprep.subr.mxu0 0.0
        %316 = vmatpush1.xpose.msra.mxu0 %v280
        %317 = vmatprep.subr.mxu0 0.0
        %318 = vmatpush1.xpose.msra.mxu0 %v279
        %319 = vmatprep.subr.mxu0 0.0
        %320 = vmatpush1.xpose.msra.mxu0 %v278
        %321 = vmatprep.subr.mxu0 0.0
        %322 = vmatpush1.xpose.msra.mxu0 %v277
        %323 = vmatprep.subr.mxu0 0.0
        %324 = vmatpush1.xpose.msra.mxu0 %v276
        %325 = vmatprep.subr.mxu0 0.0
        %326 = vmatpush1.xpose.msra.mxu0 %v275
        %327 = vmatprep.subr.mxu0 0.0
        %328 = vmatpush1.xpose.msra.mxu0 %v274
        %329 = vmatprep.subr.mxu0 0.0
        %330 = vmatpush2.xpose.msra.mxu0 0.0
        %331 = vmatprep.subr.mxu0 0.0
        %332 = vmatpush2.xpose.msra.mxu0 0.0
        %333 = vmatprep.subr.mxu0 0.0
        %334 = vmatpush2.xpose.msra.mxu0 0.0
        %335 = vmatprep.subr.mxu0 0.0
        %336 = vmatpush2.xpose.msra.mxu0 0.0
        %337 = vmatprep.subr.mxu0 0.0
        %338 = vmatpush2.xpose.msra.mxu0 0.0
        %339 = vmatprep.subr.mxu0 0.0
        %340 = vmatpush2.xpose.msra.mxu0 0.0
        %341 = vmatprep.subr.mxu0 0.0
        %342 = vmatpush2.xpose.msra.mxu0 0.0
        %343 = vmatprep.subr.mxu0 0.0
        %344 = vmatpush2.xpose.msra.mxu0 0.0
        %345 = vmatprep.subr.mxu0 0.0
        %346 = vmatpush2.xpose.msra.mxu0 0.0
        %347 = vmatprep.subr.mxu0 0.0
        %348 = vmatpush2.xpose.msra.mxu0 0.0
        %349 = vmatprep.subr.mxu0 0.0
        %350 = vmatpush2.xpose.msra.mxu0 0.0
        %351 = vmatprep.subr.mxu0 0.0
        %352 = vmatpush2.xpose.msra.mxu0 0.0
        %353 = vmatprep.subr.mxu0 0.0
        %354 = vmatpush2.xpose.msra.mxu0 0.0
        %355 = vmatprep.subr.mxu0 0.0
        %356 = vmatpush2.xpose.msra.mxu0 0.0
        %357 = vmatprep.subr.mxu0 0.0
        %358 = vmatpush2.xpose.msra.mxu0 0.0
        %359 = vmatprep.subr.mxu0 0.0
        %360 = vmatpush2.xpose.msra.mxu0 0.0
        %361 = vmatprep.mubr.f32.mxu0 0.0
        %362 = vmatmul.mubr.f32.gmra.mxu0 %v273
        %v363 = vpop.f32.mrf.mxu0
        %v364 = vadd.f32 %v295, %v363
        %v365 = vpop.f32.mrf.mxu0
        %366 = vdwg.mxu0
        %367 = vst [vmem:[%s266] sm:$0xff] %v364
        %s368 = sand.u32 %s134, 1
        %s369 = scalar_lea.sflag [#allocation6], %s368
        %s370 = sand.u32 %s134, 1
        %s371 = smul.addr %s370, 8
        %s372 = scalar_lea.vmem [#allocation9], %s371
        // Predicated region
        $region41: #{tpu_custom_call.1} parent=31 // pred_check
          %p373 = pneg %p144
        $region42: #{tpu_custom_call.1} parent=31 // pred_check_branch
          %375 = sbr.rel (%p373) target = $region44
        $region43: #{tpu_custom_call.1} parent=31 // pred_region
          %s377 = ssub.s32 128, 128
          %378 = vsyncadd %s369, %s377
          %s379 = sadd.s32 %s33, %s32
          %s380 = smul.addr %s379, 128
          %s381 = scalar_lea.hbm %s4, %s380
          %s383 = sshll.u32 %s372, 4
          %s384 = int_to_ptr.vmem [resolvable:$true] %s383
          %386 = dma.vmem_to_hbm [thread:$0]  %s384, 128, %s381, %s369
        $region44: #{tpu_custom_call.1} parent=31 // pred_fallthru
          _
      $region32: #{tpu_custom_call.1} parent=5 // pred_fallthru
        _
      %p387 = scmp.le.s32.totalorder 2, %s23
      // Predicated region
      $region45: #{tpu_custom_call.1} parent=5 // pred_check
        %p388 = pneg %p387
      $region46: #{tpu_custom_call.1} parent=5 // pred_check_branch
        %390 = sbr.rel (%p388) target = $region48
      $region47: #{tpu_custom_call.1} parent=5 // pred_region
        %s391 = ssub.s32 %s23, 2
        // Predicated region
        $region49: #{tpu_custom_call.1} parent=47 // pred_check
          %p392 = pneg %p150
        $region50: #{tpu_custom_call.1} parent=47 // pred_check_branch
          %394 = sbr.rel (%p392) target = $region52
        $region51: #{tpu_custom_call.1} parent=47 // pred_region
          %s395 = sand.u32 %s135, 1
          %s396 = scalar_lea.sflag [#allocation6], %s395
          %s397 = sand.u32 %s135, 1
          %s398 = smul.addr %s397, 8
          %s399 = scalar_lea.vmem [#allocation9], %s398
          %400 = dma.done %s396, 128
        $region52: #{tpu_custom_call.1} parent=47 // pred_fallthru
          _
      $region48: #{tpu_custom_call.1} parent=5 // pred_fallthru
        _
    $region6: #{tpu_custom_call.1} parent=1 // loop_footer
      %s27 = sadd.s32 1, %s23
    $region7: #{tpu_custom_call.1} parent=1 // loop_footer_branch
      %22 = sbr.rel target = $region3
    $region8: #{tpu_custom_call.1} parent=1 // loop_exit
      _
    %401 = vsyncpa [#allocation5], 1
    %s402 = scalar_lea.sflag [#allocation5], 1
    %403 = vsyncpa %s402, 1
    %404 = vsyncpa [#allocation8], 1
    %s405 = scalar_lea.sflag [#allocation8], 1
    %406 = vsyncpa %s405, 1
    %407 = vsyncpa [#allocation6], 1
    %s408 = scalar_lea.sflag [#allocation6], 1
    %409 = vsyncpa %s408, 1

</llo_original>
